<compile_context>
chip_gen: v7x
topology: tpu7x:2x2x1
jax: 0.10.0
libtpu: 0.0.40
codegen_flags: <defaults>
</compile_context>

<pallas_src>
import numpy as np
import jax
import jax.numpy as jnp
from jax.experimental import pallas as pl
from jax.experimental.pallas import tpu as pltpu


_LANES = 128            # vreg lane width: lane-dense output stores need multiples of this
_MAX_TILE_ROWS = 2048   # diminishing returns past ~MB-scale blocks
# Above this many MACs per plane the dense kron-M path turns MXU-bound
# (FLOP inflation ~ HW/(kh*kw)); route to the separable path instead.
_DENSE_MACS_PER_PLANE_CAP = 1 << 20


def _pair(v):
    return (v, v) if isinstance(v, int) else tuple(v)


def _round_up(v, m):
    return -(-v // m) * m


def _sublane_align(itemsize):
    # f32 -> 8 rows per sublane tile; bf16 packs 2 rows (16); int8/fp8 pack 4 (32).
    return max(8, 32 // itemsize)


def _vmem_budget_bytes():
    """Generation-aware scoped-VMEM limit for pallas_call (bytes)."""
    cap = None
    try:
        cap = getattr(pltpu.get_tpu_info(), "vmem_capacity_bytes", None)
    except Exception:
        cap = None
    if not cap:
        cap = 64 << 20          # conservative: v7x has the smallest per-core VMEM
    return int(cap) * 3 // 4    # leave room for compiler-internal scratch


def _pool_geometry(size, k, s, p):
    """PyTorch pooling geometry, ceil_mode=True.

    Returns (out_size, A, counts) where A[o, i] = 1.0 if input index i is a valid
    (non-padded) member of output window o, and counts[o] is the number of valid
    elements in window o (the count_include_pad=False divisor).
    """
    out = -((size + 2 * p - k) // -s) + 1          # ceil((size + 2p - k) / s) + 1
    if (out - 1) * s >= size + p:                  # PyTorch ceil_mode "drop last" rule
        out -= 1
    idx = np.arange(size)
    starts = np.arange(out) * s - p
    A = ((idx[None, :] >= starts[:, None]) &
         (idx[None, :] < starts[:, None] + k)).astype(np.float32)   # (out, size), 0/1
    counts = A.sum(axis=1)
    assert np.all(counts > 0), "empty pooling window (would divide by zero)"
    return out, A, counts


def _pool_matmul_kernel(x_ref, m_ref, inv_ref, o_ref):
    # x: (T, L), m: (L, Lo_pad) exact 0/1, inv: (1, Lo_pad) f32 -> o: (T, Lo_pad)
    acc = jnp.dot(x_ref[...], m_ref[...], preferred_element_type=jnp.float32)
    o_ref[...] = (acc * inv_ref[...]).astype(o_ref.dtype)   # f32 VPU post-scale


def _choose_tile_rows(nrows, per_row_bytes, fixed_bytes, budget_bytes, align,
                      target_steps=4):
    """Rows per grid step: as big as VMEM allows, but keep >= target_steps grid steps
    when the row count allows (DMA/compute overlap + megacore split on v7x)."""
    if nrows <= align:
        return nrows                                   # one block == full leading dim
    avail = max(budget_bytes - fixed_bytes, per_row_bytes * align)
    tile_vmem = max(align, (avail // per_row_bytes) // align * align)
    tile_vmem = min(tile_vmem, _MAX_TILE_ROWS)
    tile_steps = _round_up(-(-nrows // target_steps), align)
    return max(align, min(tile_vmem, tile_steps, (nrows // align) * align))


def _pool_lastdim(x2d, pool01, inv_counts, *, pad_lanes, tile_rows=None):
    """out[r, o] = (sum_l x2d[r, l] * pool01[o, l]) * inv_counts[o] — one MXU matmul
    per block plus a VPU scale. Returns (out (R, Lo_pad), Lo_pad)."""
    R, L = x2d.shape
    Lo = pool01.shape[0]
    assert pool01.shape == (Lo, L)
    dtype = x2d.dtype
    itemsize = jnp.dtype(dtype).itemsize
    Lo_pad = _round_up(Lo, _LANES) if pad_lanes else Lo    # lane-dense final stores

    Mt = np.zeros((L, Lo_pad), dtype=np.float32)
    Mt[:, :Lo] = pool01.T                                  # exact 0/1 (exact in bf16 too)
    Mt = jnp.asarray(Mt, dtype=dtype)
    inv = np.ones((1, Lo_pad), dtype=np.float32)
    inv[0, :Lo] = inv_counts
    inv = jnp.asarray(inv)

    vmem_limit = _vmem_budget_bytes()
    budget = vmem_limit - (2 << 20)                        # headroom
    align = _sublane_align(itemsize)
    # double-buffered pooling matrix + inv (grid-invariant, fetched once but 2 bufs),
    # double-buffered input/output blocks + f32 accumulator per row.
    fixed = 2 * (L * Lo_pad * itemsize + Lo_pad * 4)
    per_row = 2 * (L + Lo_pad) * itemsize + Lo_pad * 4
    if tile_rows is None:
        tile_rows = _choose_tile_rows(R, per_row, fixed, budget, align)
    tile_rows = max(1, min(tile_rows, R))
    grid = (pl.cdiv(R, tile_rows),)

    cost = pl.CostEstimate(
        flops=2 * R * L * Lo_pad,
        transcendentals=0,
        bytes_accessed=(R * L + L * Lo_pad + R * Lo_pad) * itemsize + Lo_pad * 4)

    out = pl.pallas_call(
        _pool_matmul_kernel,
        out_shape=jax.ShapeDtypeStruct((R, Lo_pad), dtype),
        grid_spec=pltpu.PrefetchScalarGridSpec(
            num_scalar_prefetch=0,
            grid=grid,
            in_specs=[
                pl.BlockSpec((tile_rows, L), lambda i: (i, 0)),
                pl.BlockSpec((L, Lo_pad), lambda i: (0, 0)),   # grid-invariant, resident
                pl.BlockSpec((1, Lo_pad), lambda i: (0, 0)),   # grid-invariant, resident
            ],
            out_specs=pl.BlockSpec((tile_rows, Lo_pad), lambda i: (i, 0)),
        ),
        compiler_params=pltpu.CompilerParams(
            dimension_semantics=("parallel",),
            vmem_limit_bytes=vmem_limit),
        cost_estimate=cost,
    )(x2d, Mt, inv)
    return out, Lo_pad


def pz_pool2d(x, kernel_size, stride, padding=0, *, path="auto", tile_rows=None):
    """PzPool2d.forward for NCHW x: AvgPool2d(ceil_mode=True, count_include_pad=False)."""
    N, C, H, W = x.shape
    kh, kw = _pair(kernel_size)
    sh, sw = _pair(stride)
    ph, pw = _pair(padding)

    H_out, A, cnt_h = _pool_geometry(H, kh, sh, ph)    # (H_out, H) 0/1 + valid counts
    W_out, B, cnt_w = _pool_geometry(W, kw, sw, pw)    # (W_out, W) 0/1 + valid counts
    HW, HoWo = H * W, H_out * W_out
    HoWo_pad = _round_up(HoWo, _LANES)
    NC = N * C
    itemsize = jnp.dtype(x.dtype).itemsize
    align = _sublane_align(itemsize)

    budget = _vmem_budget_bytes() - (2 << 20)
    dense_fixed = 2 * (HW * HoWo_pad * itemsize + HoWo_pad * 4)
    dense_per_row = 2 * (HW + HoWo_pad) * itemsize + HoWo_pad * 4
    dense_fits = dense_fixed + dense_per_row * min(align, NC) <= budget
    dense_cheap = HW * HoWo <= _DENSE_MACS_PER_PLANE_CAP

    if path == "auto":
        use_dense = dense_fits and dense_cheap
    elif path == "dense":
        if not dense_fits:
            raise ValueError("dense kron pooling matrix does not fit in VMEM; "
                             "use path='separable'")
        use_dense = True
    elif path == "separable":
        use_dense = False
    else:
        raise ValueError(f"unknown path: {path!r}")

    if use_dense:
        # One matmul for the whole pool: out = x_flat @ kron(A, B)^T, then 1/count.
        M01 = np.kron(A, B)                                       # (HoWo, HW), 0/1
        inv = (1.0 / np.outer(cnt_h, cnt_w)).reshape(-1).astype(np.float32)
        out2, lo_pad = _pool_lastdim(x.reshape(NC, HW), M01, inv,
                                     pad_lanes=True, tile_rows=tile_rows)
        if lo_pad != HoWo:
            out2 = out2[:, :HoWo]                                 # drop lane padding
        return out2.reshape(N, C, H_out, W_out)

    # Separable fallback (large planes): pool along W, transpose, pool along H.
    # Keeps the pooling matrices tiny (W_out x W and H_out x H) and the FLOPs near
    # the true pooling cost, at the price of one extra HBM round-trip of the
    # half-pooled intermediate (handled by XLA between the two calls).
    inv_w = (1.0 / cnt_w).astype(np.float32)
    inv_h = (1.0 / cnt_h).astype(np.float32)
    y1, _ = _pool_lastdim(x.reshape(NC * H, W), B, inv_w,
                          pad_lanes=False, tile_rows=tile_rows)   # (NC*H, W_out)
    y1 = y1.reshape(NC, H, W_out).transpose(0, 2, 1)              # (NC, W_out, H)
    y2, _ = _pool_lastdim(y1.reshape(NC * W_out, H), A, inv_h,
                          pad_lanes=False, tile_rows=tile_rows)   # (NC*W_out, H_out)
    y2 = y2.reshape(NC, W_out, H_out).transpose(0, 2, 1)          # (NC, H_out, W_out)
    return y2.reshape(N, C, H_out, W_out)


if __name__ == "__main__":
    key = jax.random.PRNGKey(0)
    k, s, p = 3, 2, 1                                  # module init params for the demo
    x = jax.random.normal(key, (2, 4, 16, 16), dtype=jnp.float32)

    # Exact reference: the same separable linear map with the integer-count divisor.
    H_out, A, cnt_h = _pool_geometry(16, k, s, p)
    W_out, B, cnt_w = _pool_geometry(16, k, s, p)
    ref = jnp.einsum('oh,nchw,pw->ncop', jnp.asarray(A), x, jnp.asarray(B))
    ref = ref / jnp.asarray(np.outer(cnt_h, cnt_w), dtype=jnp.float32)

    y_auto = pz_pool2d(x, k, s, p)                     # auto -> dense kron-M path here
    y_sep = pz_pool2d(x, k, s, p, path="separable")    # also exercise the fallback path
    jax.block_until_ready((y_auto, y_sep))

    for name, y in (("dense", y_auto), ("separable", y_sep)):
        assert y.shape == (2, 4, H_out, W_out), (name, y.shape)
        err = float(jnp.max(jnp.abs(y - ref)))
        assert err < 1e-4, (name, err)
    print("KERNEL_OK")
</pallas_src>

<mosaic_0001>
module attributes {stable_mosaic.version = 11 : i64} {
  func.func @_pool_matmul_kernel(%arg0: i32, %arg1: memref<8x256xf32, #tpu.memory_space<vmem>>, %arg2: memref<256x128xf32, #tpu.memory_space<vmem>>, %arg3: memref<1x128xf32, #tpu.memory_space<vmem>>, %arg4: memref<8x128xf32, #tpu.memory_space<vmem>>) attributes {dimension_semantics = [#tpu.dimension_semantics<parallel>], iteration_bounds = array<i64: 1>, scalar_prefetch = 0 : i64, scratch_operands = 0 : i64, tpu.core_type = #tpu.core_type<tc>, window_params = [{transform_indices = @transform_0, window_bounds = array<i64: 8, 256>}, {pipeline_mode = #tpu.pipeline_mode<synchronous>, transform_indices = @transform_1, window_bounds = array<i64: 256, 128>}, {pipeline_mode = #tpu.pipeline_mode<synchronous>, transform_indices = @transform_2, window_bounds = array<i64: 1, 128>}, {transform_indices = @transform_3, window_bounds = array<i64: 8, 128>}]} {
    %c0 = arith.constant 0 : index
    %c0_0 = arith.constant 0 : index
    %0 = vector.load %arg1[%c0, %c0_0] : memref<8x256xf32, #tpu.memory_space<vmem>>, vector<8x256xf32>
    %c0_1 = arith.constant 0 : index
    %c0_2 = arith.constant 0 : index
    %1 = vector.load %arg2[%c0_1, %c0_2] : memref<256x128xf32, #tpu.memory_space<vmem>>, vector<256x128xf32>
    %cst = arith.constant dense<0.000000e+00> : vector<8x128xf32>
    %2 = tpu.matmul %0, %1, %cst {dimension_numbers = #tpu.dot_dimension_numbers<[1], [0], [0], [1], [0, 0, 1, 1], [], []>} : vector<8x256xf32>, vector<256x128xf32>, vector<8x128xf32> -> vector<8x128xf32>
    %c0_3 = arith.constant 0 : index
    %c0_4 = arith.constant 0 : index
    %3 = vector.load %arg3[%c0_3, %c0_4] : memref<1x128xf32, #tpu.memory_space<vmem>>, vector<1x128xf32>
    %4 = vector.broadcast %3 : vector<1x128xf32> to vector<8x128xf32>
    %5 = arith.mulf %2, %4 : vector<8x128xf32>
    %c0_5 = arith.constant 0 : index
    %c0_6 = arith.constant 0 : index
    %6 = vector.load %arg4[%c0_5, %c0_6] : memref<8x128xf32, #tpu.memory_space<vmem>>, vector<8x128xf32>
    tpu.vector_store %arg4[%c0_5, %c0_6], %5 {strides = array<i32>} : memref<8x128xf32, #tpu.memory_space<vmem>>, vector<8x128xf32>,
    return
  }
  func.func @transform_0(%arg0: i32) -> (i32, i32) {
    %c0_i32 = arith.constant 0 : i32
    %c0_i32_0 = arith.constant 0 : i32
    return %arg0, %c0_i32 : i32, i32
  }
  func.func @transform_1(%arg0: i32) -> (i32, i32) {
    %c0_i32 = arith.constant 0 : i32
    %c0_i32_0 = arith.constant 0 : i32
    %c0_i32_1 = arith.constant 0 : i32
    return %c0_i32, %c0_i32_0 : i32, i32
  }
  func.func @transform_2(%arg0: i32) -> (i32, i32) {
    %c0_i32 = arith.constant 0 : i32
    %c0_i32_0 = arith.constant 0 : i32
    %c0_i32_1 = arith.constant 0 : i32
    return %c0_i32, %c0_i32_0 : i32, i32
  }
  func.func @transform_3(%arg0: i32) -> (i32, i32) {
    %c0_i32 = arith.constant 0 : i32
    %c0_i32_0 = arith.constant 0 : i32
    return %arg0, %c0_i32 : i32, i32
  }
}

</mosaic_0001>

<llo_original>
// kernel: tpu_custom_call.1
$region0: #{tpu_custom_call.1}
  #allocation0 [shape = 'u32[]', space=smem, size = 0x4, offset = 0x4, fixed_abs, tag = 'smem constant byte address 0x4 - core index']
  #allocation1 [shape = 'u32[144,128]{1,0:T(1,128)}', space=vmem, size = 0x12000, scoped, tag = 'internal scratch']
  %s0 = inlined_call_operand.hbm [shape: f32[8,256], index: 0, kind: input, shape index: {}]
  %s1 = inlined_call_operand.hbm [shape: f32[256,128], index: 1, kind: input, shape index: {}]
  %s2 = inlined_call_operand.vmem [shape: f32[1,128], index: 2, kind: input, shape index: {}]
  %s3 = inlined_call_operand.hbm [shape: f32[8,128], index: 3, kind: output, shape index: {}]
  %s4 = sld [smem:[#allocation0]]
  $region30: #{tpu_custom_call.1} parent=0
    _
  %s6 = ssub.s32 1, %s4
  %s7 = scalar_select 0, %s6, %s4
  $region1: #{tpu_custom_call.1} parent=0
    #allocation2 [shape = 'u8[8192]{0}', space=vmem, size = 0x2000, scoped, tag = 'input window, operand 0, single buffered']
    #allocation3 [shape = 's32[1]{0}', space=sflag, size = 0x4, scoped, tag = 'scoped memory for tpu_custom_call.1']
    #allocation4 [shape = 's32[1]{0}', space=sflag, size = 0x4, scoped, tag = 'scoped memory for tpu_custom_call.1']
    #allocation5 [shape = 'u8[131072]{0}', space=vmem, size = 0x20000, scoped, tag = 'input window, operand 1, single buffered']
    #allocation6 [shape = 's32[1]{0}', space=sflag, size = 0x4, scoped, tag = 'scoped memory for tpu_custom_call.1']
    #allocation7 [shape = 'u8[4096]{0}', space=vmem, size = 0x1000, scoped, tag = 'output window, operand 0, single buffered']
    %8 = vsyncpa [#allocation3], 0
    %9 = vsyncpa [#allocation6], 0
    %10 = vsyncpa [#allocation4], 0
    // Predicated region
    $region2: #{tpu_custom_call.1} parent=1 // pred_check
      _
    $region3: #{tpu_custom_call.1} parent=1 // pred_check_branch
      %12 = sbr.rel (0) target = $region5
    $region4: #{tpu_custom_call.1} parent=1 // pred_region
      %s14 = ssub.s32 256, 256
      %15 = vsyncadd [#allocation3], %s14
      %s17 = sshll.u32 [#allocation2], 4
      %s18 = int_to_ptr.vmem [resolvable:$true] %s17
      %20 = dma.hbm_to_vmem [thread:$0]  %s0, 256, %s18, [#allocation3]
    $region5: #{tpu_custom_call.1} parent=1 // pred_fallthru
      _
    // Predicated region
    $region6: #{tpu_custom_call.1} parent=1 // pred_check
      _
    $region7: #{tpu_custom_call.1} parent=1 // pred_check_branch
      %22 = sbr.rel (0) target = $region9
    $region8: #{tpu_custom_call.1} parent=1 // pred_region
      %s24 = ssub.s32 4096, 4096
      %25 = vsyncadd [#allocation6], %s24
      %s26 = sshll.u32 [#allocation5], 4
      %s27 = int_to_ptr.vmem [resolvable:$true] %s26
      %32 = dma.hbm_to_vmem [thread:$0]  %s1, 4096, %s27, [#allocation6], 128, 128, 8
    $region9: #{tpu_custom_call.1} parent=1 // pred_fallthru
      _
    // Predicated region
    $region10: #{tpu_custom_call.1} parent=1 // pred_check
      _
    $region11: #{tpu_custom_call.1} parent=1 // pred_check_branch
      %34 = sbr.rel (0) target = $region13
    $region12: #{tpu_custom_call.1} parent=1 // pred_region
      _
    $region13: #{tpu_custom_call.1} parent=1 // pred_fallthru
      _
    // Predicated region
    $region14: #{tpu_custom_call.1} parent=1 // pred_check
      _
    $region15: #{tpu_custom_call.1} parent=1 // pred_check_branch
      %36 = sbr.rel (0) target = $region17
    $region16: #{tpu_custom_call.1} parent=1 // pred_region
      %37 = dma.done [#allocation3], 256
    $region17: #{tpu_custom_call.1} parent=1 // pred_fallthru
      _
    // Predicated region
    $region18: #{tpu_custom_call.1} parent=1 // pred_check
      _
    $region19: #{tpu_custom_call.1} parent=1 // pred_check_branch
      %39 = sbr.rel (0) target = $region21
    $region20: #{tpu_custom_call.1} parent=1 // pred_region
      %40 = dma.done [#allocation6], 4096
    $region21: #{tpu_custom_call.1} parent=1 // pred_fallthru
      _
    %v41 = vld [vmem:[#allocation2] sm:$0xff]
    %v42 = vld [vmem:[#allocation2 + $0x8] sm:$0xff]
    %v43 = vld [vmem:[#allocation5] sm:$0xff]
    %v44 = vld [vmem:[#allocation5 + $0x8] sm:$0xff]
    %v45 = vld [vmem:[#allocation5 + $0x10] sm:$0xff]
    %v46 = vld [vmem:[#allocation5 + $0x18] sm:$0xff]
    %v47 = vld [vmem:[#allocation5 + $0x20] sm:$0xff]
    %v48 = vld [vmem:[#allocation5 + $0x28] sm:$0xff]
    %v49 = vld [vmem:[#allocation5 + $0x30] sm:$0xff]
    %v50 = vld [vmem:[#allocation5 + $0x38] sm:$0xff]
    %v51 = vld [vmem:[#allocation5 + $0x40] sm:$0xff]
    %v52 = vld [vmem:[#allocation5 + $0x48] sm:$0xff]
    %v53 = vld [vmem:[#allocation5 + $0x50] sm:$0xff]
    %v54 = vld [vmem:[#allocation5 + $0x58] sm:$0xff]
    %v55 = vld [vmem:[#allocation5 + $0x60] sm:$0xff]
    %v56 = vld [vmem:[#allocation5 + $0x68] sm:$0xff]
    %v57 = vld [vmem:[#allocation5 + $0x70] sm:$0xff]
    %v58 = vld [vmem:[#allocation5 + $0x78] sm:$0xff]
    %v59 = vld [vmem:[#allocation5 + $0x80] sm:$0xff]
    %v60 = vld [vmem:[#allocation5 + $0x88] sm:$0xff]
    %v61 = vld [vmem:[#allocation5 + $0x90] sm:$0xff]
    %v62 = vld [vmem:[#allocation5 + $0x98] sm:$0xff]
    %v63 = vld [vmem:[#allocation5 + $0xa0] sm:$0xff]
    %v64 = vld [vmem:[#allocation5 + $0xa8] sm:$0xff]
    %v65 = vld [vmem:[#allocation5 + $0xb0] sm:$0xff]
    %v66 = vld [vmem:[#allocation5 + $0xb8] sm:$0xff]
    %v67 = vld [vmem:[#allocation5 + $0xc0] sm:$0xff]
    %v68 = vld [vmem:[#allocation5 + $0xc8] sm:$0xff]
    %v69 = vld [vmem:[#allocation5 + $0xd0] sm:$0xff]
    %v70 = vld [vmem:[#allocation5 + $0xd8] sm:$0xff]
    %v71 = vld [vmem:[#allocation5 + $0xe0] sm:$0xff]
    %v72 = vld [vmem:[#allocation5 + $0xe8] sm:$0xff]
    %v73 = vld [vmem:[#allocation5 + $0xf0] sm:$0xff]
    %v74 = vld [vmem:[#allocation5 + $0xf8] sm:$0xff]
    %75 = vmatprep.subr.mxu0 0.0
    %76 = vmatpush1.msra.mxu0 %v43
    %77 = vmatprep.subr.mxu0 0.0
    %78 = vmatpush1.msra.mxu0 %v44
    %79 = vmatprep.subr.mxu0 0.0
    %80 = vmatpush1.msra.mxu0 %v45
    %81 = vmatprep.subr.mxu0 0.0
    %82 = vmatpush1.msra.mxu0 %v46
    %83 = vmatprep.subr.mxu0 0.0
    %84 = vmatpush1.msra.mxu0 %v47
    %85 = vmatprep.subr.mxu0 0.0
    %86 = vmatpush1.msra.mxu0 %v48
    %87 = vmatprep.subr.mxu0 0.0
    %88 = vmatpush1.msra.mxu0 %v49
    %89 = vmatprep.subr.mxu0 0.0
    %90 = vmatpush1.msra.mxu0 %v50
    %91 = vmatprep.subr.mxu0 0.0
    %92 = vmatpush1.msra.mxu0 %v51
    %93 = vmatprep.subr.mxu0 0.0
    %94 = vmatpush1.msra.mxu0 %v52
    %95 = vmatprep.subr.mxu0 0.0
    %96 = vmatpush1.msra.mxu0 %v53
    %97 = vmatprep.subr.mxu0 0.0
    %98 = vmatpush1.msra.mxu0 %v54
    %99 = vmatprep.subr.mxu0 0.0
    %100 = vmatpush1.msra.mxu0 %v55
    %101 = vmatprep.subr.mxu0 0.0
    %102 = vmatpush1.msra.mxu0 %v56
    %103 = vmatprep.subr.mxu0 0.0
    %104 = vmatpush1.msra.mxu0 %v57
    %105 = vmatprep.subr.mxu0 0.0
    %106 = vmatpush1.msra.mxu0 %v58
    %107 = vmatprep.subr.mxu0 0.0
    %108 = vmatpush1.msra.mxu0 %v59
    %109 = vmatprep.subr.mxu0 0.0
    %110 = vmatpush1.msra.mxu0 %v60
    %111 = vmatprep.subr.mxu0 0.0
    %112 = vmatpush1.msra.mxu0 %v61
    %113 = vmatprep.subr.mxu0 0.0
    %114 = vmatpush1.msra.mxu0 %v62
    %115 = vmatprep.subr.mxu0 0.0
    %116 = vmatpush1.msra.mxu0 %v63
    %117 = vmatprep.subr.mxu0 0.0
    %118 = vmatpush1.msra.mxu0 %v64
    %119 = vmatprep.subr.mxu0 0.0
    %120 = vmatpush1.msra.mxu0 %v65
    %121 = vmatprep.subr.mxu0 0.0
    %122 = vmatpush1.msra.mxu0 %v66
    %123 = vmatprep.subr.mxu0 0.0
    %124 = vmatpush1.msra.mxu0 %v67
    %125 = vmatprep.subr.mxu0 0.0
    %126 = vmatpush1.msra.mxu0 %v68
    %127 = vmatprep.subr.mxu0 0.0
    %128 = vmatpush1.msra.mxu0 %v69
    %129 = vmatprep.subr.mxu0 0.0
    %130 = vmatpush1.msra.mxu0 %v70
    %131 = vmatprep.subr.mxu0 0.0
    %132 = vmatpush1.msra.mxu0 %v71
    %133 = vmatprep.subr.mxu0 0.0
    %134 = vmatpush1.msra.mxu0 %v72
    %135 = vmatprep.subr.mxu0 0.0
    %136 = vmatpush1.msra.mxu0 %v73
    %137 = vmatprep.subr.mxu0 0.0
    %138 = vmatpush1.msra.mxu0 %v74
    %139 = vmatprep.mubr.f32.mxu0 %v42
    %140 = vmatmul.mubr.f32.gmra.mrb[0].mxu0 %v41
    %v141 = vpop.f32.mrb[0].mxu0
    %v142 = vadd.f32 0.0, %v141
    %v143 = vpop.f32.mrb[0].mxu0
    %144 = vdwg.mxu0
    %v145 = vld [vmem:[%s2] sm:$0x1]
    %v147 = vlaneseq
    %v148 = vshrl.u32 %v147, 7
    %v149 = vsub.s32 0, %v148
    %v150 = vrot.slane %v145, %v149
    %v152 = vmul.f32 %v142, %v150
    %153 = vst [vmem:[#allocation7] sm:$0xff] %v152
    // Predicated region
    $region22: #{tpu_custom_call.1} parent=1 // pred_check
      _
    $region23: #{tpu_custom_call.1} parent=1 // pred_check_branch
      %155 = sbr.rel (0) target = $region25
    $region24: #{tpu_custom_call.1} parent=1 // pred_region
      %s157 = ssub.s32 128, 128
      %158 = vsyncadd [#allocation4], %s157
      %s160 = sshll.u32 [#allocation7], 4
      %s161 = int_to_ptr.vmem [resolvable:$true] %s160
      %163 = dma.vmem_to_hbm [thread:$0]  %s161, 128, %s3, [#allocation4]
    $region25: #{tpu_custom_call.1} parent=1 // pred_fallthru
      _
    // Predicated region
    $region26: #{tpu_custom_call.1} parent=1 // pred_check
      _
    $region27: #{tpu_custom_call.1} parent=1 // pred_check_branch
      %165 = sbr.rel (0) target = $region29
    $region28: #{tpu_custom_call.1} parent=1 // pred_region
      %166 = dma.done [#allocation4], 128
    $region29: #{tpu_custom_call.1} parent=1 // pred_fallthru
      _
    %167 = vsyncpa [#allocation3], 1
    %168 = vsyncpa [#allocation6], 1
    %169 = vsyncpa [#allocation4], 1

</llo_original>
